<compile_context>
chip_gen: v6e
topology: v6e:2x2x1
jax: 0.10.0
libtpu: 0.0.40
codegen_flags: <defaults>
</compile_context>

<pallas_src>
import functools

import jax
import jax.numpy as jnp
from jax.experimental import pallas as pl
from jax.experimental.pallas import tpu as pltpu

LANE = 128


def _round_up(n, m):
    return ((n + m - 1) // m) * m


def _cdiv(a, b):
    return -(-a // b)


# --------------------------------------------------------------------------- #
# Kernel
# --------------------------------------------------------------------------- #
def mlp_kernel(x_ref, w1_ref, wmid_ref, wlast_ref, bmid_ref, blast_ref, o_ref,
               *, n_mid, use_bf16_matmul):
    """Fused 5-layer MLP on one (TB, S8) batch tile; params are VMEM-resident.

    x_ref     : (TB, S8)          f32   input tile (S8 = round_up(state_dim, 8))
    w1_ref    : (S8, P)           f32/bf16   layer-0 weight
    wmid_ref  : (n_mid, P, P)     f32/bf16   layers 1..n-2 weights (zero-padded)
    wlast_ref : (P, action_dim)   f32/bf16   last-layer weight (narrow output)
    bmid_ref  : (n_mid+1, 1, P)   f32   biases of layers 0..n-2 (zero-padded)
    blast_ref : (1, action_dim)   f32   last-layer bias
    o_ref     : (TB, action_dim)  f32   tanh output (narrow, no lane padding)
    """
    def mxu_in(a):
        # bf16 only at the MXU inputs; accumulate / elementwise stay f32
        # (v5e has no bf16 VPU/EUP, so bf16 elementwise would be emulated).
        return a.astype(jnp.bfloat16) if use_bf16_matmul else a

    h = x_ref[...]                                                   # (TB, S8) f32
    h = jnp.dot(mxu_in(h), w1_ref[...],
                preferred_element_type=jnp.float32) + bmid_ref[0]    # (TB, P)
    h = jnp.maximum(h, 0.0)
    for i in range(n_mid):                                           # static unroll
        h = jnp.dot(mxu_in(h), wmid_ref[i],
                    preferred_element_type=jnp.float32) + bmid_ref[i + 1]
        h = jnp.maximum(h, 0.0)
    h = jnp.dot(mxu_in(h), wlast_ref[...],
                preferred_element_type=jnp.float32) + blast_ref[...]  # (TB, A)
    o_ref[...] = jnp.tanh(h).astype(o_ref.dtype)                      # tanh on EUP


# --------------------------------------------------------------------------- #
# One-time parameter packing (hoisted out of the forward)
# --------------------------------------------------------------------------- #
def pack_params(params, state_dim, *, use_bf16_matmul=True):
    """Pack Linear params into tile-aligned slabs. Call ONCE at init, reuse."""
    n_layers = len(params)
    hidden_dims = [w.shape[1] for w, _ in params[:-1]]
    action_dim = params[-1][0].shape[1]
    P = _round_up(max(hidden_dims), LANE)       # shared hidden lane width
    S8 = _round_up(state_dim, 8)                # sublane-aligned input width
    w_dtype = jnp.bfloat16 if use_bf16_matmul else jnp.float32

    w0, _ = params[0]
    w1 = jnp.zeros((S8, P), w_dtype).at[:state_dim, :w0.shape[1]].set(
        w0.astype(w_dtype))

    n_mid = n_layers - 2
    wmid = jnp.zeros((n_mid, P, P), w_dtype)
    for i, (w, _) in enumerate(params[1:-1]):
        fi, fo = w.shape
        wmid = wmid.at[i, :fi, :fo].set(w.astype(w_dtype))

    wl, bl = params[-1]
    wlast = jnp.zeros((P, action_dim), w_dtype).at[:wl.shape[0], :].set(
        wl.astype(w_dtype))

    bmid = jnp.zeros((n_layers - 1, 1, P), jnp.float32)
    for i, (_, b) in enumerate(params[:-1]):
        bmid = bmid.at[i, :, :b.shape[-1]].set(
            b.reshape(1, -1).astype(jnp.float32))
    blast = bl.reshape(1, action_dim).astype(jnp.float32)

    meta = dict(state_dim=state_dim, action_dim=action_dim, S8=S8, P=P,
                n_mid=n_mid, use_bf16_matmul=use_bf16_matmul)
    return (w1, wmid, wlast, bmid, blast), meta


# --------------------------------------------------------------------------- #
# Forward wrapper
# --------------------------------------------------------------------------- #
def model_t2_forward(x, packed, meta, *, batch_tile=256):
    """x: (batch, state_dim) f32. packed/meta from pack_params()."""
    w1, wmid, wlast, bmid, blast = packed
    batch, state_dim = x.shape
    assert state_dim == meta["state_dim"]
    S8, P = meta["S8"], meta["P"]
    action_dim, n_mid = meta["action_dim"], meta["n_mid"]

    # Divisor-friendly batch tiling (minimal padded rows); >=2 grid steps when
    # batch >= 16 so both v7x TensorCores get work.  Use batch_tile=128 on v5e.
    rb = _round_up(batch, 8)
    n_tiles = max(1, _cdiv(rb, batch_tile))
    if batch >= 16:
        n_tiles = max(n_tiles, 2)
    tb = _round_up(_cdiv(rb, n_tiles), 8)
    grid_n = _cdiv(rb, tb)
    padded_batch = grid_n * tb

    x = x.astype(jnp.float32)
    if padded_batch != batch or S8 != state_dim:
        x_in = jnp.pad(x, ((0, padded_batch - batch), (0, S8 - state_dim)))
    else:
        x_in = x   # common case: no wrapper-side padding pass at all

    kernel = functools.partial(
        mlp_kernel, n_mid=n_mid, use_bf16_matmul=meta["use_bf16_matmul"])

    out = pl.pallas_call(
        kernel,
        out_shape=jax.ShapeDtypeStruct((padded_batch, action_dim), jnp.float32),
        grid_spec=pltpu.PrefetchScalarGridSpec(
            num_scalar_prefetch=0,
            grid=(grid_n,),
            in_specs=[
                pl.BlockSpec((tb, S8), lambda i: (i, 0)),            # x tile (unpadded lanes)
                pl.BlockSpec((S8, P), lambda i: (0, 0)),             # W1 (resident)
                pl.BlockSpec((n_mid, P, P), lambda i: (0, 0, 0)),    # mid weights (resident)
                pl.BlockSpec((P, action_dim), lambda i: (0, 0)),     # last weight (narrow)
                pl.BlockSpec((n_mid + 1, 1, P), lambda i: (0, 0, 0)),  # biases (resident)
                pl.BlockSpec((1, action_dim), lambda i: (0, 0)),     # last bias
            ],
            out_specs=pl.BlockSpec((tb, action_dim), lambda i: (i, 0)),  # narrow output
        ),
        compiler_params=pltpu.CompilerParams(
            dimension_semantics=("parallel",),     # megacore / multi-TC sharding
            vmem_limit_bytes=32 * 1024 * 1024,     # far above the <1 MiB we use
        ),
    )(x_in, w1, wmid, wlast, bmid, blast)

    return out[:batch] if padded_batch != batch else out


# --------------------------------------------------------------------------- #
# Reference + init (pure JAX)
# --------------------------------------------------------------------------- #
def init_params(key, state_dim, action_dim, hidden_dim):
    """Deterministic init mimicking PyTorch Linear default (U(+/- 1/sqrt(fan_in)))."""
    dims = [state_dim, hidden_dim, hidden_dim, hidden_dim // 2, hidden_dim // 4,
            action_dim]
    params = []
    for i in range(len(dims) - 1):
        key, kw, kb = jax.random.split(key, 3)
        fan_in, fan_out = dims[i], dims[i + 1]
        bound = 1.0 / jnp.sqrt(jnp.float32(fan_in))
        w = jax.random.uniform(kw, (fan_in, fan_out), jnp.float32, -bound, bound)
        b = jax.random.uniform(kb, (1, fan_out), jnp.float32, -bound, bound)
        params.append((w, b))
    return params


def reference_forward(x, params):
    h = x
    for i, (w, b) in enumerate(params):
        h = h @ w + b
        if i < len(params) - 1:
            h = jnp.maximum(h, 0.0)
    return jnp.tanh(h)


if __name__ == "__main__":
    # Small shapes consistent with the module: state_dim (= concat(x, u) size),
    # hidden_dim, action_dim (= n_features head).
    batch = 8
    state_dim = 16
    hidden_dim = 32
    action_dim = 8

    key = jax.random.PRNGKey(0)
    key, kx = jax.random.split(key)
    x = jax.random.normal(kx, (batch, state_dim), jnp.float32)
    params = init_params(key, state_dim, action_dim, hidden_dim)

    ref = reference_forward(x, params)

    # f32-at-MXU path (closest to the PyTorch module's numerics).  Tolerance is
    # set above bf16-rounding noise since the plain-JAX reference matmul itself
    # may use single-pass bf16 at default TPU precision.
    packed_f32, meta_f32 = pack_params(params, state_dim, use_bf16_matmul=False)
    out_f32 = jax.block_until_ready(model_t2_forward(x, packed_f32, meta_f32))
    assert out_f32.shape == (batch, action_dim)
    assert jnp.allclose(out_f32, ref, atol=2e-3, rtol=2e-3), "f32 path mismatch"

    # Default fast path: bf16 at the MXU (native on v6e/v7x), f32 accumulate,
    # f32 bias/ReLU/tanh.  Activations are re-quantized per layer (5 casts).
    packed_bf16, meta_bf16 = pack_params(params, state_dim, use_bf16_matmul=True)
    out_bf16 = jax.block_until_ready(model_t2_forward(x, packed_bf16, meta_bf16))
    assert out_bf16.shape == (batch, action_dim)
    assert jnp.allclose(out_bf16, ref, atol=5e-2, rtol=5e-2), "bf16 path diverged"

    # TODO(synk): g_function_eval / limit_g / g_tilde_eval are scalar,
    # data-dependent branching on tiny 1-D vectors (host-side glue, not a Pallas
    # hot path), so they are not kernelized.
    print("KERNEL_OK")
</pallas_src>

<mosaic_0001>
module attributes {stable_mosaic.version = 11 : i64} {
  func.func @mlp_kernel(%arg0: i32, %arg1: memref<8x16xf32, #tpu.memory_space<vmem>>, %arg2: memref<16x128xf32, #tpu.memory_space<vmem>>, %arg3: memref<3x128x128xf32, #tpu.memory_space<vmem>>, %arg4: memref<128x8xf32, #tpu.memory_space<vmem>>, %arg5: memref<4x1x128xf32, #tpu.memory_space<vmem>>, %arg6: memref<1x8xf32, #tpu.memory_space<vmem>>, %arg7: memref<8x8xf32, #tpu.memory_space<vmem>>) attributes {dimension_semantics = [#tpu.dimension_semantics<parallel>], iteration_bounds = array<i64: 1>, scalar_prefetch = 0 : i64, scratch_operands = 0 : i64, tpu.core_type = #tpu.core_type<tc>, window_params = [{transform_indices = @transform_0, window_bounds = array<i64: 8, 16>}, {pipeline_mode = #tpu.pipeline_mode<synchronous>, transform_indices = @transform_1, window_bounds = array<i64: 16, 128>}, {pipeline_mode = #tpu.pipeline_mode<synchronous>, transform_indices = @transform_2, window_bounds = array<i64: 3, 128, 128>}, {pipeline_mode = #tpu.pipeline_mode<synchronous>, transform_indices = @transform_3, window_bounds = array<i64: 128, 8>}, {pipeline_mode = #tpu.pipeline_mode<synchronous>, transform_indices = @transform_4, window_bounds = array<i64: 4, 1, 128>}, {pipeline_mode = #tpu.pipeline_mode<synchronous>, transform_indices = @transform_5, window_bounds = array<i64: 1, 8>}, {transform_indices = @transform_6, window_bounds = array<i64: 8, 8>}]} {
    %c0 = arith.constant 0 : index
    %c0_0 = arith.constant 0 : index
    %0 = vector.load %arg1[%c0, %c0_0] : memref<8x16xf32, #tpu.memory_space<vmem>>, vector<8x16xf32>
    %c0_1 = arith.constant 0 : index
    %c0_2 = arith.constant 0 : index
    %1 = vector.load %arg2[%c0_1, %c0_2] : memref<16x128xf32, #tpu.memory_space<vmem>>, vector<16x128xf32>
    %cst = arith.constant dense<0.000000e+00> : vector<8x128xf32>
    %2 = tpu.matmul %0, %1, %cst {dimension_numbers = #tpu.dot_dimension_numbers<[1], [0], [0], [1], [0, 0, 1, 1], [], []>} : vector<8x16xf32>, vector<16x128xf32>, vector<8x128xf32> -> vector<8x128xf32>
    %c0_3 = arith.constant 0 : index
    %c0_4 = arith.constant 0 : index
    %c0_5 = arith.constant 0 : index
    %3 = vector.load %arg5[%c0_3, %c0_4, %c0_5] : memref<4x1x128xf32, #tpu.memory_space<vmem>>, vector<1x1x128xf32>
    %4 = vector.shape_cast %3 : vector<1x1x128xf32> to vector<1x128xf32>
    %5 = vector.broadcast %4 : vector<1x128xf32> to vector<8x128xf32>
    %6 = arith.addf %2, %5 : vector<8x128xf32>
    %cst_6 = arith.constant 0.000000e+00 : f32
    %7 = vector.broadcast %cst_6 : f32 to vector<8x128xf32>
    %8 = arith.maximumf %6, %7 : vector<8x128xf32>
    %c0_7 = arith.constant 0 : index
    %c0_8 = arith.constant 0 : index
    %c0_9 = arith.constant 0 : index
    %9 = vector.load %arg3[%c0_7, %c0_8, %c0_9] : memref<3x128x128xf32, #tpu.memory_space<vmem>>, vector<1x128x128xf32>
    %10 = vector.shape_cast %9 : vector<1x128x128xf32> to vector<128x128xf32>
    %cst_10 = arith.constant dense<0.000000e+00> : vector<8x128xf32>
    %11 = tpu.matmul %8, %10, %cst_10 {dimension_numbers = #tpu.dot_dimension_numbers<[1], [0], [0], [1], [0, 0, 1, 1], [], []>} : vector<8x128xf32>, vector<128x128xf32>, vector<8x128xf32> -> vector<8x128xf32>
    %c1 = arith.constant 1 : index
    %c0_11 = arith.constant 0 : index
    %c0_12 = arith.constant 0 : index
    %12 = vector.load %arg5[%c1, %c0_11, %c0_12] : memref<4x1x128xf32, #tpu.memory_space<vmem>>, vector<1x1x128xf32>
    %13 = vector.shape_cast %12 : vector<1x1x128xf32> to vector<1x128xf32>
    %14 = vector.broadcast %13 : vector<1x128xf32> to vector<8x128xf32>
    %15 = arith.addf %11, %14 : vector<8x128xf32>
    %cst_13 = arith.constant 0.000000e+00 : f32
    %16 = vector.broadcast %cst_13 : f32 to vector<8x128xf32>
    %17 = arith.maximumf %15, %16 : vector<8x128xf32>
    %c1_14 = arith.constant 1 : index
    %c0_15 = arith.constant 0 : index
    %c0_16 = arith.constant 0 : index
    %18 = vector.load %arg3[%c1_14, %c0_15, %c0_16] : memref<3x128x128xf32, #tpu.memory_space<vmem>>, vector<1x128x128xf32>
    %19 = vector.shape_cast %18 : vector<1x128x128xf32> to vector<128x128xf32>
    %cst_17 = arith.constant dense<0.000000e+00> : vector<8x128xf32>
    %20 = tpu.matmul %17, %19, %cst_17 {dimension_numbers = #tpu.dot_dimension_numbers<[1], [0], [0], [1], [0, 0, 1, 1], [], []>} : vector<8x128xf32>, vector<128x128xf32>, vector<8x128xf32> -> vector<8x128xf32>
    %c2 = arith.constant 2 : index
    %c0_18 = arith.constant 0 : index
    %c0_19 = arith.constant 0 : index
    %21 = vector.load %arg5[%c2, %c0_18, %c0_19] : memref<4x1x128xf32, #tpu.memory_space<vmem>>, vector<1x1x128xf32>
    %22 = vector.shape_cast %21 : vector<1x1x128xf32> to vector<1x128xf32>
    %23 = vector.broadcast %22 : vector<1x128xf32> to vector<8x128xf32>
    %24 = arith.addf %20, %23 : vector<8x128xf32>
    %cst_20 = arith.constant 0.000000e+00 : f32
    %25 = vector.broadcast %cst_20 : f32 to vector<8x128xf32>
    %26 = arith.maximumf %24, %25 : vector<8x128xf32>
    %c2_21 = arith.constant 2 : index
    %c0_22 = arith.constant 0 : index
    %c0_23 = arith.constant 0 : index
    %27 = vector.load %arg3[%c2_21, %c0_22, %c0_23] : memref<3x128x128xf32, #tpu.memory_space<vmem>>, vector<1x128x128xf32>
    %28 = vector.shape_cast %27 : vector<1x128x128xf32> to vector<128x128xf32>
    %cst_24 = arith.constant dense<0.000000e+00> : vector<8x128xf32>
    %29 = tpu.matmul %26, %28, %cst_24 {dimension_numbers = #tpu.dot_dimension_numbers<[1], [0], [0], [1], [0, 0, 1, 1], [], []>} : vector<8x128xf32>, vector<128x128xf32>, vector<8x128xf32> -> vector<8x128xf32>
    %c3 = arith.constant 3 : index
    %c0_25 = arith.constant 0 : index
    %c0_26 = arith.constant 0 : index
    %30 = vector.load %arg5[%c3, %c0_25, %c0_26] : memref<4x1x128xf32, #tpu.memory_space<vmem>>, vector<1x1x128xf32>
    %31 = vector.shape_cast %30 : vector<1x1x128xf32> to vector<1x128xf32>
    %32 = vector.broadcast %31 : vector<1x128xf32> to vector<8x128xf32>
    %33 = arith.addf %29, %32 : vector<8x128xf32>
    %cst_27 = arith.constant 0.000000e+00 : f32
    %34 = vector.broadcast %cst_27 : f32 to vector<8x128xf32>
    %35 = arith.maximumf %33, %34 : vector<8x128xf32>
    %c0_28 = arith.constant 0 : index
    %c0_29 = arith.constant 0 : index
    %36 = vector.load %arg4[%c0_28, %c0_29] : memref<128x8xf32, #tpu.memory_space<vmem>>, vector<128x8xf32>
    %cst_30 = arith.constant dense<0.000000e+00> : vector<8x8xf32>
    %37 = tpu.matmul %35, %36, %cst_30 {dimension_numbers = #tpu.dot_dimension_numbers<[1], [0], [0], [1], [0, 0, 1, 1], [], []>} : vector<8x128xf32>, vector<128x8xf32>, vector<8x8xf32> -> vector<8x8xf32>
    %c0_31 = arith.constant 0 : index
    %c0_32 = arith.constant 0 : index
    %38 = vector.load %arg6[%c0_31, %c0_32] : memref<1x8xf32, #tpu.memory_space<vmem>>, vector<1x8xf32>
    %39 = vector.broadcast %38 : vector<1x8xf32> to vector<8x8xf32>
    %40 = arith.addf %37, %39 : vector<8x8xf32>
    %41 = math.tanh %40 : vector<8x8xf32>
    %c0_33 = arith.constant 0 : index
    %c0_34 = arith.constant 0 : index
    %42 = vector.load %arg7[%c0_33, %c0_34] : memref<8x8xf32, #tpu.memory_space<vmem>>, vector<8x8xf32>
    tpu.vector_store %arg7[%c0_33, %c0_34], %41 {strides = array<i32>} : memref<8x8xf32, #tpu.memory_space<vmem>>, vector<8x8xf32>,
    return
  }
  func.func @transform_0(%arg0: i32) -> (i32, i32) {
    %c0_i32 = arith.constant 0 : i32
    %c0_i32_0 = arith.constant 0 : i32
    return %arg0, %c0_i32 : i32, i32
  }
  func.func @transform_1(%arg0: i32) -> (i32, i32) {
    %c0_i32 = arith.constant 0 : i32
    %c0_i32_0 = arith.constant 0 : i32
    %c0_i32_1 = arith.constant 0 : i32
    return %c0_i32, %c0_i32_0 : i32, i32
  }
  func.func @transform_2(%arg0: i32) -> (i32, i32, i32) {
    %c0_i32 = arith.constant 0 : i32
    %c0_i32_0 = arith.constant 0 : i32
    %c0_i32_1 = arith.constant 0 : i32
    %c0_i32_2 = arith.constant 0 : i32
    return %c0_i32, %c0_i32_0, %c0_i32_1 : i32, i32, i32
  }
  func.func @transform_3(%arg0: i32) -> (i32, i32) {
    %c0_i32 = arith.constant 0 : i32
    %c0_i32_0 = arith.constant 0 : i32
    %c0_i32_1 = arith.constant 0 : i32
    return %c0_i32, %c0_i32_0 : i32, i32
  }
  func.func @transform_4(%arg0: i32) -> (i32, i32, i32) {
    %c0_i32 = arith.constant 0 : i32
    %c0_i32_0 = arith.constant 0 : i32
    %c0_i32_1 = arith.constant 0 : i32
    %c0_i32_2 = arith.constant 0 : i32
    return %c0_i32, %c0_i32_0, %c0_i32_1 : i32, i32, i32
  }
  func.func @transform_5(%arg0: i32) -> (i32, i32) {
    %c0_i32 = arith.constant 0 : i32
    %c0_i32_0 = arith.constant 0 : i32
    %c0_i32_1 = arith.constant 0 : i32
    return %c0_i32, %c0_i32_0 : i32, i32
  }
  func.func @transform_6(%arg0: i32) -> (i32, i32) {
    %c0_i32 = arith.constant 0 : i32
    %c0_i32_0 = arith.constant 0 : i32
    return %arg0, %c0_i32 : i32, i32
  }
}

</mosaic_0001>

<llo_original>
// kernel: tpu_custom_call.1
$region0: #{tpu_custom_call.1}
  #allocation0 [shape = 'u32[]', space=smem, size = 0x4, offset = 0x4, fixed_abs, tag = 'smem constant byte address 0x4 - core index']
  #allocation1 [shape = 'u32[144,128]{1,0:T(1,128)}', space=vmem, size = 0x12000, scoped, tag = 'internal scratch']
  %s0 = inlined_call_operand.vmem [shape: f32[8,16], index: 0, kind: input, shape index: {}]
  %s1 = inlined_call_operand.vmem [shape: f32[16,128], index: 1, kind: input, shape index: {}]
  %s2 = inlined_call_operand.hbm [shape: f32[3,128,128], index: 2, kind: input, shape index: {}]
  %s3 = inlined_call_operand.vmem [shape: f32[128,8], index: 3, kind: input, shape index: {}]
  %s4 = inlined_call_operand.vmem [shape: f32[4,1,128], index: 4, kind: input, shape index: {}]
  %s5 = inlined_call_operand.vmem [shape: f32[1,8], index: 5, kind: input, shape index: {}]
  %s6 = inlined_call_operand.hbm [shape: f32[8,8], index: 6, kind: output, shape index: {}]
  %s7 = sld [smem:[#allocation0]]
  $region38: #{tpu_custom_call.1} parent=0
    _
  %s9 = ssub.s32 1, %s7
  %s10 = scalar_select 0, %s9, %s7
  $region1: #{tpu_custom_call.1} parent=0
    #allocation2 [shape = 'u8[196608]{0}', space=vmem, size = 0x30000, scoped, tag = 'input window, operand 2, single buffered']
    #allocation3 [shape = 's32[1]{0}', space=sflag, size = 0x4, scoped, tag = 'scoped memory for tpu_custom_call.1']
    #allocation4 [shape = 's32[1]{0}', space=sflag, size = 0x4, scoped, tag = 'scoped memory for tpu_custom_call.1']
    #allocation5 [shape = 'u8[4096]{0}', space=vmem, size = 0x1000, scoped, tag = 'output window, operand 0, single buffered']
    %11 = vsyncpa [#allocation3], 0
    %12 = vsyncpa [#allocation4], 0
    // Predicated region
    $region2: #{tpu_custom_call.1} parent=1 // pred_check
      _
    $region3: #{tpu_custom_call.1} parent=1 // pred_check_branch
      %14 = sbr.rel (0) target = $region5
    $region4: #{tpu_custom_call.1} parent=1 // pred_region
      _
    $region5: #{tpu_custom_call.1} parent=1 // pred_fallthru
      _
    // Predicated region
    $region6: #{tpu_custom_call.1} parent=1 // pred_check
      _
    $region7: #{tpu_custom_call.1} parent=1 // pred_check_branch
      %16 = sbr.rel (0) target = $region9
    $region8: #{tpu_custom_call.1} parent=1 // pred_region
      _
    $region9: #{tpu_custom_call.1} parent=1 // pred_fallthru
      _
    // Predicated region
    $region10: #{tpu_custom_call.1} parent=1 // pred_check
      _
    $region11: #{tpu_custom_call.1} parent=1 // pred_check_branch
      %18 = sbr.rel (0) target = $region13
    $region12: #{tpu_custom_call.1} parent=1 // pred_region
      %s20 = ssub.s32 6144, 6144
      %21 = vsyncadd [#allocation3], %s20
      %s22 = sshll.u32 [#allocation2], 4
      %s23 = int_to_ptr.vmem [resolvable:$true] %s22
      %28 = dma.hbm_to_vmem [thread:$0]  %s2, 6144, %s23, [#allocation3], 128, 128, 8
    $region13: #{tpu_custom_call.1} parent=1 // pred_fallthru
      _
    // Predicated region
    $region14: #{tpu_custom_call.1} parent=1 // pred_check
      _
    $region15: #{tpu_custom_call.1} parent=1 // pred_check_branch
      %30 = sbr.rel (0) target = $region17
    $region16: #{tpu_custom_call.1} parent=1 // pred_region
      _
    $region17: #{tpu_custom_call.1} parent=1 // pred_fallthru
      _
    // Predicated region
    $region18: #{tpu_custom_call.1} parent=1 // pred_check
      _
    $region19: #{tpu_custom_call.1} parent=1 // pred_check_branch
      %32 = sbr.rel (0) target = $region21
    $region20: #{tpu_custom_call.1} parent=1 // pred_region
      _
    $region21: #{tpu_custom_call.1} parent=1 // pred_fallthru
      _
    // Predicated region
    $region22: #{tpu_custom_call.1} parent=1 // pred_check
      _
    $region23: #{tpu_custom_call.1} parent=1 // pred_check_branch
      %34 = sbr.rel (0) target = $region25
    $region24: #{tpu_custom_call.1} parent=1 // pred_region
      _
    $region25: #{tpu_custom_call.1} parent=1 // pred_fallthru
      _
    // Predicated region
    $region26: #{tpu_custom_call.1} parent=1 // pred_check
      _
    $region27: #{tpu_custom_call.1} parent=1 // pred_check_branch
      %36 = sbr.rel (0) target = $region29
    $region28: #{tpu_custom_call.1} parent=1 // pred_region
      %37 = dma.done [#allocation3], 6144
    $region29: #{tpu_custom_call.1} parent=1 // pred_fallthru
      _
    %v38 = vld [vmem:[%s0] sm:$0xff]
    %v39 = vld [vmem:[%s1] sm:$0xff]
    %v40 = vld [vmem:[%s1 + $0x8] sm:$0xff]
    %v41 = vld [vmem:[%s4] sm:$0x1]
    %v43 = vlaneseq
    %v44 = vshrl.u32 %v43, 7
    %v45 = vsub.s32 0, %v44
    %v46 = vrot.slane %v41, %v45
    %vm48 = vcmask 130048
    %v50 = vsel %vm48, %v38, 0
    %52 = vmatprep.subr.mxu0 0.0
    %53 = vmatpush1.msra.mxu0 0.0
    %54 = vmatprep.subr.mxu0 0.0
    %55 = vmatpush1.msra.mxu0 0.0
    %56 = vmatprep.subr.mxu0 0.0
    %57 = vmatpush1.msra.mxu0 0.0
    %58 = vmatprep.subr.mxu0 0.0
    %59 = vmatpush1.msra.mxu0 0.0
    %60 = vmatprep.subr.mxu0 0.0
    %61 = vmatpush1.msra.mxu0 0.0
    %62 = vmatprep.subr.mxu0 0.0
    %63 = vmatpush1.msra.mxu0 0.0
    %64 = vmatprep.subr.mxu0 0.0
    %65 = vmatpush1.msra.mxu0 0.0
    %66 = vmatprep.subr.mxu0 0.0
    %67 = vmatpush1.msra.mxu0 0.0
    %68 = vmatprep.subr.mxu0 0.0
    %69 = vmatpush1.msra.mxu0 0.0
    %70 = vmatprep.subr.mxu0 0.0
    %71 = vmatpush1.msra.mxu0 0.0
    %72 = vmatprep.subr.mxu0 0.0
    %73 = vmatpush1.msra.mxu0 0.0
    %74 = vmatprep.subr.mxu0 0.0
    %75 = vmatpush1.msra.mxu0 0.0
    %76 = vmatprep.subr.mxu0 0.0
    %77 = vmatpush1.msra.mxu0 0.0
    %78 = vmatprep.subr.mxu0 0.0
    %79 = vmatpush1.msra.mxu0 0.0
    %80 = vmatprep.subr.mxu0 0.0
    %81 = vmatpush1.msra.mxu0 %v40
    %82 = vmatprep.subr.mxu0 0.0
    %83 = vmatpush1.msra.mxu0 %v39
    %84 = vmatprep.subr.mxu0 0.0
    %85 = vmatpush2.msra.mxu0 0.0
    %86 = vmatprep.subr.mxu0 0.0
    %87 = vmatpush2.msra.mxu0 0.0
    %88 = vmatprep.subr.mxu0 0.0
    %89 = vmatpush2.msra.mxu0 0.0
    %90 = vmatprep.subr.mxu0 0.0
    %91 = vmatpush2.msra.mxu0 0.0
    %92 = vmatprep.subr.mxu0 0.0
    %93 = vmatpush2.msra.mxu0 0.0
    %94 = vmatprep.subr.mxu0 0.0
    %95 = vmatpush2.msra.mxu0 0.0
    %96 = vmatprep.subr.mxu0 0.0
    %97 = vmatpush2.msra.mxu0 0.0
    %98 = vmatprep.subr.mxu0 0.0
    %99 = vmatpush2.msra.mxu0 0.0
    %100 = vmatprep.subr.mxu0 0.0
    %101 = vmatpush2.msra.mxu0 0.0
    %102 = vmatprep.subr.mxu0 0.0
    %103 = vmatpush2.msra.mxu0 0.0
    %104 = vmatprep.subr.mxu0 0.0
    %105 = vmatpush2.msra.mxu0 0.0
    %106 = vmatprep.subr.mxu0 0.0
    %107 = vmatpush2.msra.mxu0 0.0
    %108 = vmatprep.subr.mxu0 0.0
    %109 = vmatpush2.msra.mxu0 0.0
    %110 = vmatprep.subr.mxu0 0.0
    %111 = vmatpush2.msra.mxu0 0.0
    %112 = vmatprep.subr.mxu0 0.0
    %113 = vmatpush2.msra.mxu0 0.0
    %114 = vmatprep.subr.mxu0 0.0
    %115 = vmatpush2.msra.mxu0 0.0
    %116 = vmatprep.mubr.f32.mxu0 0.0
    %117 = vmatmul.mubr.f32.gmra.mxu0 %v50
    %v118 = vpop.f32.mrf.mxu0
    %v119 = vadd.f32 %v46, %v118
    %v120 = vpop.f32.mrf.mxu0
    %121 = vdwg.mxu0
    %v122 = vmax.f32 %v119, 0.0
    %v123 = vld [vmem:[#allocation2] sm:$0xff]
    %v124 = vld [vmem:[#allocation2 + $0x8] sm:$0xff]
    %v125 = vld [vmem:[#allocation2 + $0x10] sm:$0xff]
    %v126 = vld [vmem:[#allocation2 + $0x18] sm:$0xff]
    %v127 = vld [vmem:[#allocation2 + $0x20] sm:$0xff]
    %v128 = vld [vmem:[#allocation2 + $0x28] sm:$0xff]
    %v129 = vld [vmem:[#allocation2 + $0x30] sm:$0xff]
    %v130 = vld [vmem:[#allocation2 + $0x38] sm:$0xff]
    %v131 = vld [vmem:[#allocation2 + $0x40] sm:$0xff]
    %v132 = vld [vmem:[#allocation2 + $0x48] sm:$0xff]
    %v133 = vld [vmem:[#allocation2 + $0x50] sm:$0xff]
    %v134 = vld [vmem:[#allocation2 + $0x58] sm:$0xff]
    %v135 = vld [vmem:[#allocation2 + $0x60] sm:$0xff]
    %v136 = vld [vmem:[#allocation2 + $0x68] sm:$0xff]
    %v137 = vld [vmem:[#allocation2 + $0x70] sm:$0xff]
    %v138 = vld [vmem:[#allocation2 + $0x78] sm:$0xff]
    %s139 = scalar_lea.vmem %s4, 1
    %v140 = vld [vmem:[%s139] sm:$0x1]
    %v142 = vlaneseq
    %v143 = vshrl.u32 %v142, 7
    %v144 = vsub.s32 0, %v143
    %v145 = vrot.slane %v140, %v144
    %147 = vmatprep.subr.mxu0 0.0
    %148 = vmatpush1.msra.mxu0 %v138
    %149 = vmatprep.subr.mxu0 0.0
    %150 = vmatpush1.msra.mxu0 %v137
    %151 = vmatprep.subr.mxu0 0.0
    %152 = vmatpush1.msra.mxu0 %v136
    %153 = vmatprep.subr.mxu0 0.0
    %154 = vmatpush1.msra.mxu0 %v135
    %155 = vmatprep.subr.mxu0 0.0
    %156 = vmatpush1.msra.mxu0 %v134
    %157 = vmatprep.subr.mxu0 0.0
    %158 = vmatpush1.msra.mxu0 %v133
    %159 = vmatprep.subr.mxu0 0.0
    %160 = vmatpush1.msra.mxu0 %v132
    %161 = vmatprep.subr.mxu0 0.0
    %162 = vmatpush1.msra.mxu0 %v131
    %163 = vmatprep.subr.mxu0 0.0
    %164 = vmatpush1.msra.mxu0 %v130
    %165 = vmatprep.subr.mxu0 0.0
    %166 = vmatpush1.msra.mxu0 %v129
    %167 = vmatprep.subr.mxu0 0.0
    %168 = vmatpush1.msra.mxu0 %v128
    %169 = vmatprep.subr.mxu0 0.0
    %170 = vmatpush1.msra.mxu0 %v127
    %171 = vmatprep.subr.mxu0 0.0
    %172 = vmatpush1.msra.mxu0 %v126
    %173 = vmatprep.subr.mxu0 0.0
    %174 = vmatpush1.msra.mxu0 %v125
    %175 = vmatprep.subr.mxu0 0.0
    %176 = vmatpush1.msra.mxu0 %v124
    %177 = vmatprep.subr.mxu0 0.0
    %178 = vmatpush1.msra.mxu0 %v123
    %179 = vmatprep.subr.mxu0 0.0
    %180 = vmatpush2.msra.mxu0 0.0
    %181 = vmatprep.subr.mxu0 0.0
    %182 = vmatpush2.msra.mxu0 0.0
    %183 = vmatprep.subr.mxu0 0.0
    %184 = vmatpush2.msra.mxu0 0.0
    %185 = vmatprep.subr.mxu0 0.0
    %186 = vmatpush2.msra.mxu0 0.0
    %187 = vmatprep.subr.mxu0 0.0
    %188 = vmatpush2.msra.mxu0 0.0
    %189 = vmatprep.subr.mxu0 0.0
    %190 = vmatpush2.msra.mxu0 0.0
    %191 = vmatprep.subr.mxu0 0.0
    %192 = vmatpush2.msra.mxu0 0.0
    %193 = vmatprep.subr.mxu0 0.0
    %194 = vmatpush2.msra.mxu0 0.0
    %195 = vmatprep.subr.mxu0 0.0
    %196 = vmatpush2.msra.mxu0 0.0
    %197 = vmatprep.subr.mxu0 0.0
    %198 = vmatpush2.msra.mxu0 0.0
    %199 = vmatprep.subr.mxu0 0.0
    %200 = vmatpush2.msra.mxu0 0.0
    %201 = vmatprep.subr.mxu0 0.0
    %202 = vmatpush2.msra.mxu0 0.0
    %203 = vmatprep.subr.mxu0 0.0
    %204 = vmatpush2.msra.mxu0 0.0
    %205 = vmatprep.subr.mxu0 0.0
    %206 = vmatpush2.msra.mxu0 0.0
    %207 = vmatprep.subr.mxu0 0.0
    %208 = vmatpush2.msra.mxu0 0.0
    %209 = vmatprep.subr.mxu0 0.0
    %210 = vmatpush2.msra.mxu0 0.0
    %211 = vmatprep.mubr.f32.mxu0 0.0
    %212 = vmatmul.mubr.f32.gmra.mxu0 %v122
    %v213 = vpop.f32.mrf.mxu0
    %v214 = vadd.f32 %v145, %v213
    %v215 = vpop.f32.mrf.mxu0
    %216 = vdwg.mxu0
    %v217 = vmax.f32 %v214, 0.0
    %s218 = scalar_lea.vmem [#allocation2], 128
    %v219 = vld [vmem:[%s218] sm:$0xff]
    %v220 = vld [vmem:[%s218 + $0x8] sm:$0xff]
    %v221 = vld [vmem:[%s218 + $0x10] sm:$0xff]
    %v222 = vld [vmem:[%s218 + $0x18] sm:$0xff]
    %v223 = vld [vmem:[%s218 + $0x20] sm:$0xff]
    %v224 = vld [vmem:[%s218 + $0x28] sm:$0xff]
    %v225 = vld [vmem:[%s218 + $0x30] sm:$0xff]
    %v226 = vld [vmem:[%s218 + $0x38] sm:$0xff]
    %v227 = vld [vmem:[%s218 + $0x40] sm:$0xff]
    %v228 = vld [vmem:[%s218 + $0x48] sm:$0xff]
    %v229 = vld [vmem:[%s218 + $0x50] sm:$0xff]
    %v230 = vld [vmem:[%s218 + $0x58] sm:$0xff]
    %v231 = vld [vmem:[%s218 + $0x60] sm:$0xff]
    %v232 = vld [vmem:[%s218 + $0x68] sm:$0xff]
    %v233 = vld [vmem:[%s218 + $0x70] sm:$0xff]
    %v234 = vld [vmem:[%s218 + $0x78] sm:$0xff]
    %s235 = scalar_lea.vmem %s4, 2
    %v236 = vld [vmem:[%s235] sm:$0x1]
    %v238 = vlaneseq
    %v239 = vshrl.u32 %v238, 7
    %v240 = vsub.s32 0, %v239
    %v241 = vrot.slane %v236, %v240
    %243 = vmatprep.subr.mxu0 0.0
    %244 = vmatpush1.msra.mxu0 %v234
    %245 = vmatprep.subr.mxu0 0.0
    %246 = vmatpush1.msra.mxu0 %v233
    %247 = vmatprep.subr.mxu0 0.0
    %248 = vmatpush1.msra.mxu0 %v232
    %249 = vmatprep.subr.mxu0 0.0
    %250 = vmatpush1.msra.mxu0 %v231
    %251 = vmatprep.subr.mxu0 0.0
    %252 = vmatpush1.msra.mxu0 %v230
    %253 = vmatprep.subr.mxu0 0.0
    %254 = vmatpush1.msra.mxu0 %v229
    %255 = vmatprep.subr.mxu0 0.0
    %256 = vmatpush1.msra.mxu0 %v228
    %257 = vmatprep.subr.mxu0 0.0
    %258 = vmatpush1.msra.mxu0 %v227
    %259 = vmatprep.subr.mxu0 0.0
    %260 = vmatpush1.msra.mxu0 %v226
    %261 = vmatprep.subr.mxu0 0.0
    %262 = vmatpush1.msra.mxu0 %v225
    %263 = vmatprep.subr.mxu0 0.0
    %264 = vmatpush1.msra.mxu0 %v224
    %265 = vmatprep.subr.mxu0 0.0
    %266 = vmatpush1.msra.mxu0 %v223
    %267 = vmatprep.subr.mxu0 0.0
    %268 = vmatpush1.msra.mxu0 %v222
    %269 = vmatprep.subr.mxu0 0.0
    %270 = vmatpush1.msra.mxu0 %v221
    %271 = vmatprep.subr.mxu0 0.0
    %272 = vmatpush1.msra.mxu0 %v220
    %273 = vmatprep.subr.mxu0 0.0
    %274 = vmatpush1.msra.mxu0 %v219
    %275 = vmatprep.subr.mxu0 0.0
    %276 = vmatpush2.msra.mxu0 0.0
    %277 = vmatprep.subr.mxu0 0.0
    %278 = vmatpush2.msra.mxu0 0.0
    %279 = vmatprep.subr.mxu0 0.0
    %280 = vmatpush2.msra.mxu0 0.0
    %281 = vmatprep.subr.mxu0 0.0
    %282 = vmatpush2.msra.mxu0 0.0
    %283 = vmatprep.subr.mxu0 0.0
    %284 = vmatpush2.msra.mxu0 0.0
    %285 = vmatprep.subr.mxu0 0.0
    %286 = vmatpush2.msra.mxu0 0.0
    %287 = vmatprep.subr.mxu0 0.0
    %288 = vmatpush2.msra.mxu0 0.0
    %289 = vmatprep.subr.mxu0 0.0
    %290 = vmatpush2.msra.mxu0 0.0
    %291 = vmatprep.subr.mxu0 0.0
    %292 = vmatpush2.msra.mxu0 0.0
    %293 = vmatprep.subr.mxu0 0.0
    %294 = vmatpush2.msra.mxu0 0.0
    %295 = vmatprep.subr.mxu0 0.0
    %296 = vmatpush2.msra.mxu0 0.0
    %297 = vmatprep.subr.mxu0 0.0
    %298 = vmatpush2.msra.mxu0 0.0
    %299 = vmatprep.subr.mxu0 0.0
    %300 = vmatpush2.msra.mxu0 0.0
    %301 = vmatprep.subr.mxu0 0.0
    %302 = vmatpush2.msra.mxu0 0.0
    %303 = vmatprep.subr.mxu0 0.0
    %304 = vmatpush2.msra.mxu0 0.0
    %305 = vmatprep.subr.mxu0 0.0
    %306 = vmatpush2.msra.mxu0 0.0
    %307 = vmatprep.mubr.f32.mxu0 0.0
    %308 = vmatmul.mubr.f32.gmra.mxu0 %v217
    %v309 = vpop.f32.mrf.mxu0
    %v310 = vadd.f32 %v241, %v309
    %v311 = vpop.f32.mrf.mxu0
    %312 = vdwg.mxu0
    %v313 = vmax.f32 %v310, 0.0
    %s314 = scalar_lea.vmem [#allocation2], 256
    %v315 = vld [vmem:[%s314] sm:$0xff]
    %v316 = vld [vmem:[%s314 + $0x8] sm:$0xff]
    %v317 = vld [vmem:[%s314 + $0x10] sm:$0xff]
    %v318 = vld [vmem:[%s314 + $0x18] sm:$0xff]
    %v319 = vld [vmem:[%s314 + $0x20] sm:$0xff]
    %v320 = vld [vmem:[%s314 + $0x28] sm:$0xff]
    %v321 = vld [vmem:[%s314 + $0x30] sm:$0xff]
    %v322 = vld [vmem:[%s314 + $0x38] sm:$0xff]
    %v323 = vld [vmem:[%s314 + $0x40] sm:$0xff]
    %v324 = vld [vmem:[%s314 + $0x48] sm:$0xff]
    %v325 = vld [vmem:[%s314 + $0x50] sm:$0xff]
    %v326 = vld [vmem:[%s314 + $0x58] sm:$0xff]
    %v327 = vld [vmem:[%s314 + $0x60] sm:$0xff]
    %v328 = vld [vmem:[%s314 + $0x68] sm:$0xff]
    %v329 = vld [vmem:[%s314 + $0x70] sm:$0xff]
    %v330 = vld [vmem:[%s314 + $0x78] sm:$0xff]
    %s331 = scalar_lea.vmem %s4, 3
    %v332 = vld [vmem:[%s331] sm:$0x1]
    %v334 = vlaneseq
    %v335 = vshrl.u32 %v334, 7
    %v336 = vsub.s32 0, %v335
    %v337 = vrot.slane %v332, %v336
    %339 = vmatprep.subr.mxu0 0.0
    %340 = vmatpush1.msra.mxu0 %v330
    %341 = vmatprep.subr.mxu0 0.0
    %342 = vmatpush1.msra.mxu0 %v329
    %343 = vmatprep.subr.mxu0 0.0
    %344 = vmatpush1.msra.mxu0 %v328
    %345 = vmatprep.subr.mxu0 0.0
    %346 = vmatpush1.msra.mxu0 %v327
    %347 = vmatprep.subr.mxu0 0.0
    %348 = vmatpush1.msra.mxu0 %v326
    %349 = vmatprep.subr.mxu0 0.0
    %350 = vmatpush1.msra.mxu0 %v325
    %351 = vmatprep.subr.mxu0 0.0
    %352 = vmatpush1.msra.mxu0 %v324
    %353 = vmatprep.subr.mxu0 0.0
    %354 = vmatpush1.msra.mxu0 %v323
    %355 = vmatprep.subr.mxu0 0.0
    %356 = vmatpush1.msra.mxu0 %v322
    %357 = vmatprep.subr.mxu0 0.0
    %358 = vmatpush1.msra.mxu0 %v321
    %359 = vmatprep.subr.mxu0 0.0
    %360 = vmatpush1.msra.mxu0 %v320
    %361 = vmatprep.subr.mxu0 0.0
    %362 = vmatpush1.msra.mxu0 %v319
    %363 = vmatprep.subr.mxu0 0.0
    %364 = vmatpush1.msra.mxu0 %v318
    %365 = vmatprep.subr.mxu0 0.0
    %366 = vmatpush1.msra.mxu0 %v317
    %367 = vmatprep.subr.mxu0 0.0
    %368 = vmatpush1.msra.mxu0 %v316
    %369 = vmatprep.subr.mxu0 0.0
    %370 = vmatpush1.msra.mxu0 %v315
    %371 = vmatprep.subr.mxu0 0.0
    %372 = vmatpush2.msra.mxu0 0.0
    %373 = vmatprep.subr.mxu0 0.0
    %374 = vmatpush2.msra.mxu0 0.0
    %375 = vmatprep.subr.mxu0 0.0
    %376 = vmatpush2.msra.mxu0 0.0
    %377 = vmatprep.subr.mxu0 0.0
    %378 = vmatpush2.msra.mxu0 0.0
    %379 = vmatprep.subr.mxu0 0.0
    %380 = vmatpush2.msra.mxu0 0.0
    %381 = vmatprep.subr.mxu0 0.0
    %382 = vmatpush2.msra.mxu0 0.0
    %383 = vmatprep.subr.mxu0 0.0
    %384 = vmatpush2.msra.mxu0 0.0
    %385 = vmatprep.subr.mxu0 0.0
    %386 = vmatpush2.msra.mxu0 0.0
    %387 = vmatprep.subr.mxu0 0.0
    %388 = vmatpush2.msra.mxu0 0.0
    %389 = vmatprep.subr.mxu0 0.0
    %390 = vmatpush2.msra.mxu0 0.0
    %391 = vmatprep.subr.mxu0 0.0
    %392 = vmatpush2.msra.mxu0 0.0
    %393 = vmatprep.subr.mxu0 0.0
    %394 = vmatpush2.msra.mxu0 0.0
    %395 = vmatprep.subr.mxu0 0.0
    %396 = vmatpush2.msra.mxu0 0.0
    %397 = vmatprep.subr.mxu0 0.0
    %398 = vmatpush2.msra.mxu0 0.0
    %399 = vmatprep.subr.mxu0 0.0
    %400 = vmatpush2.msra.mxu0 0.0
    %401 = vmatprep.subr.mxu0 0.0
    %402 = vmatpush2.msra.mxu0 0.0
    %403 = vmatprep.mubr.f32.mxu0 0.0
    %404 = vmatmul.mubr.f32.gmra.mxu0 %v313
    %v405 = vpop.f32.mrf.mxu0
    %v406 = vadd.f32 %v337, %v405
    %v407 = vpop.f32.mrf.mxu0
    %408 = vdwg.mxu0
    %v409 = vmax.f32 %v406, 0.0
    %v410 = vld [vmem:[%s3] sm:$0xff]
    %v411 = vld [vmem:[%s3 + $0x8] sm:$0xff]
    %v412 = vld [vmem:[%s3 + $0x10] sm:$0xff]
    %v413 = vld [vmem:[%s3 + $0x18] sm:$0xff]
    %v414 = vld [vmem:[%s3 + $0x20] sm:$0xff]
    %v415 = vld [vmem:[%s3 + $0x28] sm:$0xff]
    %v416 = vld [vmem:[%s3 + $0x30] sm:$0xff]
    %v417 = vld [vmem:[%s3 + $0x38] sm:$0xff]
    %v418 = vld [vmem:[%s3 + $0x40] sm:$0xff]
    %v419 = vld [vmem:[%s3 + $0x48] sm:$0xff]
    %v420 = vld [vmem:[%s3 + $0x50] sm:$0xff]
    %v421 = vld [vmem:[%s3 + $0x58] sm:$0xff]
    %v422 = vld [vmem:[%s3 + $0x60] sm:$0xff]
    %v423 = vld [vmem:[%s3 + $0x68] sm:$0xff]
    %v424 = vld [vmem:[%s3 + $0x70] sm:$0xff]
    %v425 = vld [vmem:[%s3 + $0x78] sm:$0xff]
    %v426 = vld [vmem:[%s5] sm:$0x1]
    %v428 = vlaneseq
    %v429 = vshrl.u32 %v428, 7
    %v430 = vsub.s32 0, %v429
    %v431 = vrot.slane %v426, %v430
    %433 = vmatprep.subr.mxu0 0.0
    %434 = vmatpush1.msra.mxu0 %v425
    %435 = vmatprep.subr.mxu0 0.0
    %436 = vmatpush1.msra.mxu0 %v424
    %437 = vmatprep.subr.mxu0 0.0
    %438 = vmatpush1.msra.mxu0 %v423
    %439 = vmatprep.subr.mxu0 0.0
    %440 = vmatpush1.msra.mxu0 %v422
    %441 = vmatprep.subr.mxu0 0.0
    %442 = vmatpush1.msra.mxu0 %v421
    %443 = vmatprep.subr.mxu0 0.0
    %444 = vmatpush1.msra.mxu0 %v420
    %445 = vmatprep.subr.mxu0 0.0
    %446 = vmatpush1.msra.mxu0 %v419
    %447 = vmatprep.subr.mxu0 0.0
    %448 = vmatpush1.msra.mxu0 %v418
    %449 = vmatprep.subr.mxu0 0.0
    %450 = vmatpush1.msra.mxu0 %v417
    %451 = vmatprep.subr.mxu0 0.0
    %452 = vmatpush1.msra.mxu0 %v416
    %453 = vmatprep.subr.mxu0 0.0
    %454 = vmatpush1.msra.mxu0 %v415
    %455 = vmatprep.subr.mxu0 0.0
    %456 = vmatpush1.msra.mxu0 %v414
    %457 = vmatprep.subr.mxu0 0.0
    %458 = vmatpush1.msra.mxu0 %v413
    %459 = vmatprep.subr.mxu0 0.0
    %460 = vmatpush1.msra.mxu0 %v412
    %461 = vmatprep.subr.mxu0 0.0
    %462 = vmatpush1.msra.mxu0 %v411
    %463 = vmatprep.subr.mxu0 0.0
    %464 = vmatpush1.msra.mxu0 %v410
    %465 = vmatprep.subr.mxu0 0.0
    %466 = vmatpush2.msra.mxu0 0.0
    %467 = vmatprep.subr.mxu0 0.0
    %468 = vmatpush2.msra.mxu0 0.0
    %469 = vmatprep.subr.mxu0 0.0
    %470 = vmatpush2.msra.mxu0 0.0
    %471 = vmatprep.subr.mxu0 0.0
    %472 = vmatpush2.msra.mxu0 0.0
    %473 = vmatprep.subr.mxu0 0.0
    %474 = vmatpush2.msra.mxu0 0.0
    %475 = vmatprep.subr.mxu0 0.0
    %476 = vmatpush2.msra.mxu0 0.0
    %477 = vmatprep.subr.mxu0 0.0
    %478 = vmatpush2.msra.mxu0 0.0
    %479 = vmatprep.subr.mxu0 0.0
    %480 = vmatpush2.msra.mxu0 0.0
    %481 = vmatprep.subr.mxu0 0.0
    %482 = vmatpush2.msra.mxu0 0.0
    %483 = vmatprep.subr.mxu0 0.0
    %484 = vmatpush2.msra.mxu0 0.0
    %485 = vmatprep.subr.mxu0 0.0
    %486 = vmatpush2.msra.mxu0 0.0
    %487 = vmatprep.subr.mxu0 0.0
    %488 = vmatpush2.msra.mxu0 0.0
    %489 = vmatprep.subr.mxu0 0.0
    %490 = vmatpush2.msra.mxu0 0.0
    %491 = vmatprep.subr.mxu0 0.0
    %492 = vmatpush2.msra.mxu0 0.0
    %493 = vmatprep.subr.mxu0 0.0
    %494 = vmatpush2.msra.mxu0 0.0
    %495 = vmatprep.subr.mxu0 0.0
    %496 = vmatpush2.msra.mxu0 0.0
    %497 = vmatprep.mubr.f32.mxu0 0.0
    %498 = vmatmul.mubr.f32.gmra.mxu0 %v409
    %v499 = vpop.f32.mrf.mxu0
    %v500 = vadd.f32 %v431, %v499
    %v501 = vpop.f32.mrf.mxu0
    %502 = vdwg.mxu0
    %v503 = vtanh.pop %v500
    %vm504 = vcmask 64512
    %505 = vst.msk [vmem:[#allocation5] sm:$0xff] %vm504, %v503
    // Predicated region
    $region30: #{tpu_custom_call.1} parent=1 // pred_check
      _
    $region31: #{tpu_custom_call.1} parent=1 // pred_check_branch
      %507 = sbr.rel (0) target = $region33
    $region32: #{tpu_custom_call.1} parent=1 // pred_region
      %s509 = ssub.s32 128, 128
      %510 = vsyncadd [#allocation4], %s509
      %s512 = sshll.u32 [#allocation5], 4
      %s513 = int_to_ptr.vmem [resolvable:$true] %s512
      %515 = dma.vmem_to_hbm [thread:$0]  %s513, 128, %s6, [#allocation4]
    $region33: #{tpu_custom_call.1} parent=1 // pred_fallthru
      _
    // Predicated region
    $region34: #{tpu_custom_call.1} parent=1 // pred_check
      _
    $region35: #{tpu_custom_call.1} parent=1 // pred_check_branch
      %517 = sbr.rel (0) target = $region37
    $region36: #{tpu_custom_call.1} parent=1 // pred_region
      %518 = dma.done [#allocation4], 128
    $region37: #{tpu_custom_call.1} parent=1 // pred_fallthru
      _
    %519 = vsyncpa [#allocation3], 1
    %520 = vsyncpa [#allocation4], 1

</llo_original>
